<compile_context>
chip_gen: v7x
topology: tpu7x:2x2x1
jax: 0.10.0
libtpu: 0.0.40
codegen_flags: <defaults>
</compile_context>

<pallas_src>
import functools

import numpy as np
import jax
import jax.numpy as jnp
from jax.experimental import pallas as pl
from jax.experimental.pallas import tpu as pltpu

_FEATURES = 10          # Linear(10, n_classes) input dim
_K_PAD = 128            # padded contraction dim (lane-dense)
_LANES = 128            # lane width used to pad n_classes
_TILE_B = 512           # row-tile for the gridded path
_NO_GRID_MAX_ROWS = 1024  # at/below this, skip the grid (per-step overhead not worth it)


def _round_up(x, m):
    return ((x + m - 1) // m) * m


def _linear_kernel(x_ref, w_ref, b_ref, o_ref):
    """One MXU pass: logits = x @ W_pad + b_pad.

    x_ref : VMEM (TB, K_PAD)    f32   (cols >= 10 hit zero weight rows)
    w_ref : VMEM (K_PAD, N_PAD) f32   (rows >= 10 are zero)
    b_ref : VMEM (1, N_PAD)     f32
    o_ref : VMEM (TB, N_PAD)    f32
    """
    o_ref[...] = (
        jnp.dot(x_ref[...], w_ref[...], preferred_element_type=jnp.float32)
        + b_ref[...]
    )


@functools.lru_cache(maxsize=None)
def _make_linear(b_pad, n_pad):
    """Build (and cache) a jitted pallas_call for a (b_pad, n_pad) padded problem.

    b_pad is a power-of-two bucket of the SEP count, so the Mosaic compile is
    reused across calls; n_pad is fixed per model.
    """
    if b_pad <= _NO_GRID_MAX_ROWS:
        # Small-batch fast path: no grid, full-extent VMEM blocks.
        call = pl.pallas_call(
            _linear_kernel,
            out_shape=jax.ShapeDtypeStruct((b_pad, n_pad), jnp.float32),
            in_specs=[
                pl.BlockSpec(memory_space=pltpu.MemorySpace.VMEM),  # mock data
                pl.BlockSpec(memory_space=pltpu.MemorySpace.VMEM),  # padded weight
                pl.BlockSpec(memory_space=pltpu.MemorySpace.VMEM),  # padded bias
            ],
            out_specs=pl.BlockSpec(memory_space=pltpu.MemorySpace.VMEM),
        )
    else:
        # Large-batch path: 1-D grid over rows; weight/bias stay resident.
        assert b_pad % _TILE_B == 0
        call = pl.pallas_call(
            _linear_kernel,
            out_shape=jax.ShapeDtypeStruct((b_pad, n_pad), jnp.float32),
            grid=(b_pad // _TILE_B,),
            in_specs=[
                pl.BlockSpec((_TILE_B, _K_PAD), lambda i: (i, 0)),
                pl.BlockSpec((_K_PAD, n_pad), lambda i: (0, 0)),
                pl.BlockSpec((1, n_pad), lambda i: (0, 0)),
            ],
            out_specs=pl.BlockSpec((_TILE_B, n_pad), lambda i: (i, 0)),
            compiler_params=pltpu.CompilerParams(
                dimension_semantics=("parallel",)),  # shard rows across TCs (v7x)
        )
    return jax.jit(call)


class MockModelPallas:
    """JAX/Pallas port of MockModel."""

    def __init__(self, sep_id, n_classes, key):
        self.sep_id = int(sep_id)
        self.n_classes = int(n_classes)
        self._n_pad = _round_up(max(self.n_classes, 1), _LANES)

        kw, kb, self._key = jax.random.split(key, 3)
        # torch.nn.Linear(10, n_classes): weight (n_classes, 10), bias (n_classes,),
        # both Uniform(-1/sqrt(10), 1/sqrt(10)).
        bound = 1.0 / np.sqrt(float(_FEATURES))
        self.weight = jax.random.uniform(
            kw, (self.n_classes, _FEATURES), jnp.float32, -bound, bound)
        self.bias = jax.random.uniform(
            kb, (self.n_classes,), jnp.float32, -bound, bound)

        # Lane-dense, zero-padded parameter slabs used by the kernel.
        w_pad = jnp.zeros((_K_PAD, self._n_pad), jnp.float32)
        self.w_pad = w_pad.at[:_FEATURES, : self.n_classes].set(self.weight.T)
        b_pad = jnp.zeros((1, self._n_pad), jnp.float32)
        self.b_pad = b_pad.at[0, : self.n_classes].set(self.bias)

        self.last_mock_data = None  # (batch_size, 10) randoms from the last forward

    def forward(self, input_ids, attention_mask):
        del attention_mask  # unused, exactly as in the PyTorch module

        # SEP count: one device-side reduce, one scalar host sync (needed for the
        # dynamic output shape; the torch reference transfers the whole tensor).
        batch_size = int(jnp.sum(jnp.asarray(input_ids) == self.sep_id,
                                 dtype=jnp.int32))

        # Power-of-two bucket of the batch -> bounded number of compiles,
        # O(batch_size) kernel work (not O(n_tokens)).
        b_pad = max(8, int(pl.next_power_of_2(max(batch_size, 1))))

        # Fresh uniform[0,1) mock data per call (torch.rand semantics).
        self._key, sub = jax.random.split(self._key)
        mock_full = jax.random.uniform(sub, (b_pad, _K_PAD), jnp.float32)

        logits_pad = _make_linear(b_pad, self._n_pad)(
            mock_full, self.w_pad, self.b_pad)

        self.last_mock_data = mock_full[:batch_size, :_FEATURES]
        return logits_pad[:batch_size, : self.n_classes]


if __name__ == "__main__":
    SEP_ID = 102       # e.g. BERT [SEP]
    N_CLASSES = 4

    key = jax.random.PRNGKey(0)
    k_ids, k_params = jax.random.split(key)

    model = MockModelPallas(sep_id=SEP_ID, n_classes=N_CLASSES, key=k_params)
    w_np = np.asarray(model.weight)
    b_np = np.asarray(model.bias)

    # --- Small-batch (no-grid) path: (batch=2, seq=8) with one SEP per sequence.
    input_ids = jax.random.randint(k_ids, (2, 8), 0, 200, dtype=jnp.int32)
    input_ids = input_ids.at[:, -1].set(SEP_ID)
    attention_mask = jnp.ones((2, 8), dtype=jnp.int32)

    logits = jax.block_until_ready(model.forward(input_ids, attention_mask))
    expected_b = int(np.sum(np.asarray(input_ids) == SEP_ID))
    assert logits.shape == (expected_b, N_CLASSES), logits.shape
    assert logits.dtype == jnp.float32

    mock = np.asarray(jax.device_get(model.last_mock_data))
    assert mock.shape == (expected_b, _FEATURES), mock.shape
    assert np.all((mock >= 0.0) & (mock < 1.0)), "mock data not in [0, 1)"
    ref = mock @ w_np.T + b_np
    np.testing.assert_allclose(np.asarray(logits), ref, rtol=1e-5, atol=1e-5)

    # Second forward with the same shapes: hits the compile cache, fresh randoms.
    logits2 = jax.block_until_ready(model.forward(input_ids, attention_mask))
    assert logits2.shape == logits.shape
    assert np.all(np.isfinite(np.asarray(logits2)))

    # --- Large-batch (gridded, "parallel") path: 3x512 tokens, all SEP -> 1536 rows.
    input_ids_big = jnp.full((3, 512), SEP_ID, dtype=jnp.int32)
    mask_big = jnp.ones((3, 512), dtype=jnp.int32)
    logits_big = jax.block_until_ready(model.forward(input_ids_big, mask_big))
    assert logits_big.shape == (3 * 512, N_CLASSES), logits_big.shape
    mock_big = np.asarray(jax.device_get(model.last_mock_data))
    ref_big = mock_big @ w_np.T + b_np
    np.testing.assert_allclose(np.asarray(logits_big), ref_big, rtol=1e-5, atol=1e-5)

    print("KERNEL_OK")
</pallas_src>

<mosaic_0001>
module attributes {stable_mosaic.version = 11 : i64} {
  func.func @_linear_kernel(%arg0: memref<8x128xf32, #tpu.memory_space<vmem>>, %arg1: memref<128x128xf32, #tpu.memory_space<vmem>>, %arg2: memref<1x128xf32, #tpu.memory_space<vmem>>, %arg3: memref<8x128xf32, #tpu.memory_space<vmem>>) attributes {dimension_semantics = [], scalar_prefetch = 0 : i64, scratch_operands = 0 : i64, tpu.core_type = #tpu.core_type<tc>} {
    %c0 = arith.constant 0 : index
    %c0_0 = arith.constant 0 : index
    %0 = vector.load %arg0[%c0, %c0_0] : memref<8x128xf32, #tpu.memory_space<vmem>>, vector<8x128xf32>
    %c0_1 = arith.constant 0 : index
    %c0_2 = arith.constant 0 : index
    %1 = vector.load %arg1[%c0_1, %c0_2] : memref<128x128xf32, #tpu.memory_space<vmem>>, vector<128x128xf32>
    %cst = arith.constant dense<0.000000e+00> : vector<8x128xf32>
    %2 = tpu.matmul %0, %1, %cst {dimension_numbers = #tpu.dot_dimension_numbers<[1], [0], [0], [1], [0, 0, 1, 1], [], []>} : vector<8x128xf32>, vector<128x128xf32>, vector<8x128xf32> -> vector<8x128xf32>
    %c0_3 = arith.constant 0 : index
    %c0_4 = arith.constant 0 : index
    %3 = vector.load %arg2[%c0_3, %c0_4] : memref<1x128xf32, #tpu.memory_space<vmem>>, vector<1x128xf32>
    %4 = vector.broadcast %3 : vector<1x128xf32> to vector<8x128xf32>
    %5 = arith.addf %2, %4 : vector<8x128xf32>
    %c0_5 = arith.constant 0 : index
    %c0_6 = arith.constant 0 : index
    %6 = vector.load %arg3[%c0_5, %c0_6] : memref<8x128xf32, #tpu.memory_space<vmem>>, vector<8x128xf32>
    tpu.vector_store %arg3[%c0_5, %c0_6], %5 {strides = array<i32>} : memref<8x128xf32, #tpu.memory_space<vmem>>, vector<8x128xf32>,
    return
  }
}

</mosaic_0001>

<llo_original>
// kernel: tpu_custom_call.1
$region0: #{tpu_custom_call.1}
  #allocation0 [shape = 'u32[]', space=smem, size = 0x4, offset = 0x4, fixed_abs, tag = 'smem constant byte address 0x4 - core index']
  #allocation1 [shape = 'u32[144,128]{1,0:T(1,128)}', space=vmem, size = 0x12000, scoped, tag = 'internal scratch']
  %s0 = inlined_call_operand.hbm [shape: f32[8,128], index: 0, kind: input, shape index: {}]
  %s1 = inlined_call_operand.hbm [shape: f32[128,128], index: 1, kind: input, shape index: {}]
  %s2 = inlined_call_operand.vmem [shape: f32[1,128], index: 2, kind: input, shape index: {}]
  %s3 = inlined_call_operand.hbm [shape: f32[8,128], index: 3, kind: output, shape index: {}]
  %s4 = sld [smem:[#allocation0]]
  $region30: #{tpu_custom_call.1} parent=0
    _
  %s6 = ssub.s32 1, %s4
  %s7 = scalar_select 0, %s6, %s4
  $region1: #{tpu_custom_call.1} parent=0
    #allocation2 [shape = 'u8[4096]{0}', space=vmem, size = 0x1000, scoped, tag = 'input window, operand 0, single buffered']
    #allocation3 [shape = 's32[1]{0}', space=sflag, size = 0x4, scoped, tag = 'scoped memory for tpu_custom_call.1']
    #allocation4 [shape = 's32[1]{0}', space=sflag, size = 0x4, scoped, tag = 'scoped memory for tpu_custom_call.1']
    #allocation5 [shape = 'u8[65536]{0}', space=vmem, size = 0x10000, scoped, tag = 'input window, operand 1, single buffered']
    #allocation6 [shape = 's32[1]{0}', space=sflag, size = 0x4, scoped, tag = 'scoped memory for tpu_custom_call.1']
    #allocation7 [shape = 'u8[4096]{0}', space=vmem, size = 0x1000, scoped, tag = 'output window, operand 0, single buffered']
    %8 = vsyncpa [#allocation3], 0
    %9 = vsyncpa [#allocation6], 0
    %10 = vsyncpa [#allocation4], 0
    // Predicated region
    $region2: #{tpu_custom_call.1} parent=1 // pred_check
      _
    $region3: #{tpu_custom_call.1} parent=1 // pred_check_branch
      %12 = sbr.rel (0) target = $region5
    $region4: #{tpu_custom_call.1} parent=1 // pred_region
      %s14 = ssub.s32 128, 128
      %15 = vsyncadd [#allocation3], %s14
      %s17 = sshll.u32 [#allocation2], 4
      %s18 = int_to_ptr.vmem [resolvable:$true] %s17
      %20 = dma.hbm_to_vmem [thread:$0]  %s0, 128, %s18, [#allocation3]
    $region5: #{tpu_custom_call.1} parent=1 // pred_fallthru
      _
    // Predicated region
    $region6: #{tpu_custom_call.1} parent=1 // pred_check
      _
    $region7: #{tpu_custom_call.1} parent=1 // pred_check_branch
      %22 = sbr.rel (0) target = $region9
    $region8: #{tpu_custom_call.1} parent=1 // pred_region
      %s24 = ssub.s32 2048, 2048
      %25 = vsyncadd [#allocation6], %s24
      %s26 = sshll.u32 [#allocation5], 4
      %s27 = int_to_ptr.vmem [resolvable:$true] %s26
      %32 = dma.hbm_to_vmem [thread:$0]  %s1, 2048, %s27, [#allocation6], 128, 128, 8
    $region9: #{tpu_custom_call.1} parent=1 // pred_fallthru
      _
    // Predicated region
    $region10: #{tpu_custom_call.1} parent=1 // pred_check
      _
    $region11: #{tpu_custom_call.1} parent=1 // pred_check_branch
      %34 = sbr.rel (0) target = $region13
    $region12: #{tpu_custom_call.1} parent=1 // pred_region
      _
    $region13: #{tpu_custom_call.1} parent=1 // pred_fallthru
      _
    // Predicated region
    $region14: #{tpu_custom_call.1} parent=1 // pred_check
      _
    $region15: #{tpu_custom_call.1} parent=1 // pred_check_branch
      %36 = sbr.rel (0) target = $region17
    $region16: #{tpu_custom_call.1} parent=1 // pred_region
      %37 = dma.done [#allocation3], 128
    $region17: #{tpu_custom_call.1} parent=1 // pred_fallthru
      _
    // Predicated region
    $region18: #{tpu_custom_call.1} parent=1 // pred_check
      _
    $region19: #{tpu_custom_call.1} parent=1 // pred_check_branch
      %39 = sbr.rel (0) target = $region21
    $region20: #{tpu_custom_call.1} parent=1 // pred_region
      %40 = dma.done [#allocation6], 2048
    $region21: #{tpu_custom_call.1} parent=1 // pred_fallthru
      _
    %v41 = vld [vmem:[#allocation2] sm:$0xff]
    %v42 = vld [vmem:[#allocation5] sm:$0xff]
    %v43 = vld [vmem:[#allocation5 + $0x8] sm:$0xff]
    %v44 = vld [vmem:[#allocation5 + $0x10] sm:$0xff]
    %v45 = vld [vmem:[#allocation5 + $0x18] sm:$0xff]
    %v46 = vld [vmem:[#allocation5 + $0x20] sm:$0xff]
    %v47 = vld [vmem:[#allocation5 + $0x28] sm:$0xff]
    %v48 = vld [vmem:[#allocation5 + $0x30] sm:$0xff]
    %v49 = vld [vmem:[#allocation5 + $0x38] sm:$0xff]
    %v50 = vld [vmem:[#allocation5 + $0x40] sm:$0xff]
    %v51 = vld [vmem:[#allocation5 + $0x48] sm:$0xff]
    %v52 = vld [vmem:[#allocation5 + $0x50] sm:$0xff]
    %v53 = vld [vmem:[#allocation5 + $0x58] sm:$0xff]
    %v54 = vld [vmem:[#allocation5 + $0x60] sm:$0xff]
    %v55 = vld [vmem:[#allocation5 + $0x68] sm:$0xff]
    %v56 = vld [vmem:[#allocation5 + $0x70] sm:$0xff]
    %v57 = vld [vmem:[#allocation5 + $0x78] sm:$0xff]
    %v58 = vld [vmem:[%s2] sm:$0x1]
    %v60 = vlaneseq
    %v61 = vshrl.u32 %v60, 7
    %v62 = vsub.s32 0, %v61
    %v63 = vrot.slane %v58, %v62
    %65 = vmatprep.subr.mxu0 0.0
    %66 = vmatpush1.msra.mxu0 %v42
    %67 = vmatprep.subr.mxu0 0.0
    %68 = vmatpush1.msra.mxu0 %v43
    %69 = vmatprep.subr.mxu0 0.0
    %70 = vmatpush1.msra.mxu0 %v44
    %71 = vmatprep.subr.mxu0 0.0
    %72 = vmatpush1.msra.mxu0 %v45
    %73 = vmatprep.subr.mxu0 0.0
    %74 = vmatpush1.msra.mxu0 %v46
    %75 = vmatprep.subr.mxu0 0.0
    %76 = vmatpush1.msra.mxu0 %v47
    %77 = vmatprep.subr.mxu0 0.0
    %78 = vmatpush1.msra.mxu0 %v48
    %79 = vmatprep.subr.mxu0 0.0
    %80 = vmatpush1.msra.mxu0 %v49
    %81 = vmatprep.subr.mxu0 0.0
    %82 = vmatpush1.msra.mxu0 %v50
    %83 = vmatprep.subr.mxu0 0.0
    %84 = vmatpush1.msra.mxu0 %v51
    %85 = vmatprep.subr.mxu0 0.0
    %86 = vmatpush1.msra.mxu0 %v52
    %87 = vmatprep.subr.mxu0 0.0
    %88 = vmatpush1.msra.mxu0 %v53
    %89 = vmatprep.subr.mxu0 0.0
    %90 = vmatpush1.msra.mxu0 %v54
    %91 = vmatprep.subr.mxu0 0.0
    %92 = vmatpush1.msra.mxu0 %v55
    %93 = vmatprep.subr.mxu0 0.0
    %94 = vmatpush1.msra.mxu0 %v56
    %95 = vmatprep.subr.mxu0 0.0
    %96 = vmatpush1.msra.mxu0 %v57
    %97 = vmatprep.subr.mxu0 0.0
    %98 = vmatpush1.msra.mxu0 0.0
    %99 = vmatprep.subr.mxu0 0.0
    %100 = vmatpush1.msra.mxu0 0.0
    %101 = vmatprep.subr.mxu0 0.0
    %102 = vmatpush1.msra.mxu0 0.0
    %103 = vmatprep.subr.mxu0 0.0
    %104 = vmatpush1.msra.mxu0 0.0
    %105 = vmatprep.subr.mxu0 0.0
    %106 = vmatpush1.msra.mxu0 0.0
    %107 = vmatprep.subr.mxu0 0.0
    %108 = vmatpush1.msra.mxu0 0.0
    %109 = vmatprep.subr.mxu0 0.0
    %110 = vmatpush1.msra.mxu0 0.0
    %111 = vmatprep.subr.mxu0 0.0
    %112 = vmatpush1.msra.mxu0 0.0
    %113 = vmatprep.subr.mxu0 0.0
    %114 = vmatpush1.msra.mxu0 0.0
    %115 = vmatprep.subr.mxu0 0.0
    %116 = vmatpush1.msra.mxu0 0.0
    %117 = vmatprep.subr.mxu0 0.0
    %118 = vmatpush1.msra.mxu0 0.0
    %119 = vmatprep.subr.mxu0 0.0
    %120 = vmatpush1.msra.mxu0 0.0
    %121 = vmatprep.subr.mxu0 0.0
    %122 = vmatpush1.msra.mxu0 0.0
    %123 = vmatprep.subr.mxu0 0.0
    %124 = vmatpush1.msra.mxu0 0.0
    %125 = vmatprep.subr.mxu0 0.0
    %126 = vmatpush1.msra.mxu0 0.0
    %127 = vmatprep.subr.mxu0 0.0
    %128 = vmatpush1.msra.mxu0 0.0
    %129 = vmatprep.mubr.f32.mxu0 0.0
    %130 = vmatmul.mubr.f32.gmra.mrb[0].mxu0 %v41
    %v131 = vpop.f32.mrb[0].mxu0
    %v132 = vadd.f32 %v63, %v131
    %v133 = vpop.f32.mrb[0].mxu0
    %134 = vdwg.mxu0
    %135 = vst [vmem:[#allocation7] sm:$0xff] %v132
    // Predicated region
    $region22: #{tpu_custom_call.1} parent=1 // pred_check
      _
    $region23: #{tpu_custom_call.1} parent=1 // pred_check_branch
      %137 = sbr.rel (0) target = $region25
    $region24: #{tpu_custom_call.1} parent=1 // pred_region
      %s139 = ssub.s32 128, 128
      %140 = vsyncadd [#allocation4], %s139
      %s142 = sshll.u32 [#allocation7], 4
      %s143 = int_to_ptr.vmem [resolvable:$true] %s142
      %145 = dma.vmem_to_hbm [thread:$0]  %s143, 128, %s3, [#allocation4]
    $region25: #{tpu_custom_call.1} parent=1 // pred_fallthru
      _
    // Predicated region
    $region26: #{tpu_custom_call.1} parent=1 // pred_check
      _
    $region27: #{tpu_custom_call.1} parent=1 // pred_check_branch
      %147 = sbr.rel (0) target = $region29
    $region28: #{tpu_custom_call.1} parent=1 // pred_region
      %148 = dma.done [#allocation4], 128
    $region29: #{tpu_custom_call.1} parent=1 // pred_fallthru
      _
    %149 = vsyncpa [#allocation3], 1
    %150 = vsyncpa [#allocation6], 1
    %151 = vsyncpa [#allocation4], 1

</llo_original>
